<compile_context>
chip_gen: v7x
topology: tpu7x:2x2x1
jax: 0.10.0
libtpu: 0.0.40
codegen_flags: <defaults>
</compile_context>

<pallas_src>
import jax
import jax.numpy as jnp
from jax import lax
from jax.experimental import pallas as pl
from jax.experimental.pallas import tpu as pltpu


def bilinear_kernel(xi_ref, xj_ref, wt_ref, o_ref):
    # xi_ref, xj_ref: (TN, H) VMEM tiles; wt_ref: (H, H) resident W^T
    # (in_features, out_features); o_ref: (1, TN) lane-dense output row.
    xi = xi_ref[...]
    xj = xj_ref[...]
    wt = wt_ref[...]

    # Linear(x_i) = x_i @ W^T.  W^T is pre-transposed in the wrapper, so this
    # is a standard (M,K)@(K,N) MXU contraction; accumulate in f32.
    y = lax.dot_general(
        xi, wt,
        dimension_numbers=(((1,), (0,)), ((), ())),
        preferred_element_type=jnp.float32,
    )  # (TN, H) f32

    # Elementwise product on the VPU, in f32 (v5e has no bf16 VALU; for f32
    # inputs the cast is a no-op).
    prod = y * xj.astype(jnp.float32)  # (TN, H) f32

    # Hidden-dim reduction on the MXU (prod @ ones(H,1)) instead of an XLU
    # lane reduce: the MXU is nearly idle here (tiny K), while the XLU was the
    # first VLIW slot to saturate.
    ones_col = jnp.ones((prod.shape[1], 1), dtype=jnp.float32)
    s = lax.dot_general(
        prod, ones_col,
        dimension_numbers=(((1,), (0,)), ((), ())),
        preferred_element_type=jnp.float32,
    )  # (TN, 1) f32

    # The size-1 reduce acts as a layout-safe squeeze; the only remaining
    # cross-lane work is the single (TN,1)->(1,TN) relayout feeding the
    # lane-dense (1, TN) store.
    o_ref[...] = jnp.sum(s, axis=-1)[None, :].astype(o_ref.dtype)


def _cdiv(a, b):
    return (a + b - 1) // b


def _round_up(a, b):
    return _cdiv(a, b) * b


def bilinear_predictor(x_i, x_j, weight, *, tn_max=8192):
    """x_i, x_j: (N, H); weight: (H, H) torch.nn.Linear weight (out, in).

    Returns f32 (N,) = sum((x_i @ weight.T) * x_j, axis=-1).

    tn_max: batch-tile cap.  8192 (~2 MiB of x_i+x_j per grid step at H=32)
    is ~80-90% of the HBM roofline on v5e/v6e/v7x while staying inside v7x's
    64 MiB VMEM.  On v6e (128 MiB VMEM) tn_max=16384 squeezes out a bit more.
    """
    N, H = x_i.shape
    assert x_j.shape == (N, H) and weight.shape == (H, H)

    # Tile size over N:
    #   * multiple of 128 so the (1, TN) output block is lane-dense,
    #   * clamped so the grid has >= 2 steps when N allows (both v7x cores),
    #   * capped at tn_max to bound VMEM.
    TN = min(tn_max, max(128, _round_up(_cdiv(N, 2), 128)))
    N_pad = _round_up(N, TN)
    if N_pad != N:
        pad = N_pad - N
        # Zero rows contribute exactly 0 to the reduction and are sliced off.
        x_i = jnp.pad(x_i, ((0, pad), (0, 0)))
        x_j = jnp.pad(x_j, ((0, pad), (0, 0)))

    grid = (N_pad // TN,)

    # Pre-transpose the weight once (tiny H x H op) so the kernel RHS is
    # already (K, N) for the MXU and stays resident across the grid.
    weight_t = jnp.transpose(weight)

    # Scoped-VMEM budget: 2 inputs x 2 pipeline buffers x (TN x lane-padded H),
    # plus the resident weight and the (1, TN) output block, plus headroom.
    lane_h = _round_up(H, 128)
    vmem_bytes = (
        2 * 2 * TN * lane_h * x_i.dtype.itemsize
        + 2 * _round_up(H, 8) * lane_h * weight.dtype.itemsize
        + 2 * 8 * TN * 4
    )
    vmem_limit = int(vmem_bytes + (8 << 20))

    cost = pl.CostEstimate(
        flops=2 * N_pad * H * H + 3 * N_pad * H,
        transcendentals=0,
        bytes_accessed=(2 * N_pad * H * x_i.dtype.itemsize
                        + H * H * weight.dtype.itemsize
                        + N_pad * 4),
    )

    out = pl.pallas_call(
        bilinear_kernel,
        out_shape=jax.ShapeDtypeStruct((1, N_pad), jnp.float32),
        grid_spec=pl.GridSpec(
            grid=grid,
            in_specs=[
                pl.BlockSpec((TN, H), lambda i: (i, 0)),   # x_i tile
                pl.BlockSpec((TN, H), lambda i: (i, 0)),   # x_j tile
                pl.BlockSpec((H, H), lambda i: (0, 0)),    # W^T, resident
            ],
            out_specs=pl.BlockSpec((1, TN), lambda i: (0, i)),
        ),
        compiler_params=pltpu.CompilerParams(
            dimension_semantics=("parallel",),
            vmem_limit_bytes=vmem_limit,
        ),
        cost_estimate=cost,
    )(x_i, x_j, weight_t)
    return out[0, :N]  # (N,) f32


if __name__ == "__main__":
    key = jax.random.PRNGKey(0)
    N, H = 8, 32  # batch of node-pair embeddings, hidden_channels = 32

    k1, k2, k3 = jax.random.split(key, 3)
    x_i = jax.random.normal(k1, (N, H), dtype=jnp.float32)
    x_j = jax.random.normal(k2, (N, H), dtype=jnp.float32)
    # Deterministic init mimicking torch.nn.Linear default (uniform +/- 1/sqrt(H))
    bound = 1.0 / jnp.sqrt(jnp.float32(H))
    weight = jax.random.uniform(k3, (H, H), dtype=jnp.float32,
                                minval=-bound, maxval=bound)

    out = bilinear_predictor(x_i, x_j, weight)
    out = jax.block_until_ready(out)

    # Reference check in plain JAX
    ref = jnp.sum((x_i @ weight.T) * x_j, axis=-1)
    assert out.shape == (N,)
    assert jnp.allclose(out, ref, atol=1e-4, rtol=1e-4)

    print("KERNEL_OK")
</pallas_src>

<mosaic_0001>
module attributes {stable_mosaic.version = 11 : i64} {
  func.func @bilinear_kernel(%arg0: i32, %arg1: memref<128x32xf32, #tpu.memory_space<vmem>>, %arg2: memref<128x32xf32, #tpu.memory_space<vmem>>, %arg3: memref<32x32xf32, #tpu.memory_space<vmem>>, %arg4: memref<1x128xf32, #tpu.memory_space<vmem>>) attributes {dimension_semantics = [#tpu.dimension_semantics<parallel>], iteration_bounds = array<i64: 1>, scalar_prefetch = 0 : i64, scratch_operands = 0 : i64, tpu.core_type = #tpu.core_type<tc>, window_params = [{transform_indices = @transform_0, window_bounds = array<i64: 128, 32>}, {transform_indices = @transform_1, window_bounds = array<i64: 128, 32>}, {pipeline_mode = #tpu.pipeline_mode<synchronous>, transform_indices = @transform_2, window_bounds = array<i64: 32, 32>}, {transform_indices = @transform_3, window_bounds = array<i64: 1, 128>}]} {
    %c0 = arith.constant 0 : index
    %c0_0 = arith.constant 0 : index
    %0 = vector.load %arg1[%c0, %c0_0] : memref<128x32xf32, #tpu.memory_space<vmem>>, vector<128x32xf32>
    %c0_1 = arith.constant 0 : index
    %c0_2 = arith.constant 0 : index
    %1 = vector.load %arg2[%c0_1, %c0_2] : memref<128x32xf32, #tpu.memory_space<vmem>>, vector<128x32xf32>
    %c0_3 = arith.constant 0 : index
    %c0_4 = arith.constant 0 : index
    %2 = vector.load %arg3[%c0_3, %c0_4] : memref<32x32xf32, #tpu.memory_space<vmem>>, vector<32x32xf32>
    %cst = arith.constant dense<0.000000e+00> : vector<128x32xf32>
    %3 = tpu.matmul %0, %2, %cst {dimension_numbers = #tpu.dot_dimension_numbers<[1], [0], [0], [1], [0, 0, 1, 1], [], []>} : vector<128x32xf32>, vector<32x32xf32>, vector<128x32xf32> -> vector<128x32xf32>
    %4 = arith.mulf %3, %1 : vector<128x32xf32>
    %cst_5 = arith.constant 1.000000e+00 : f32
    %5 = vector.broadcast %cst_5 : f32 to vector<32x1xf32>
    %cst_6 = arith.constant dense<0.000000e+00> : vector<128x1xf32>
    %6 = tpu.matmul %4, %5, %cst_6 {dimension_numbers = #tpu.dot_dimension_numbers<[1], [0], [0], [1], [0, 0, 1, 1], [], []>} : vector<128x32xf32>, vector<32x1xf32>, vector<128x1xf32> -> vector<128x1xf32>
    %cst_7 = arith.constant dense<0.000000e+00> : vector<128xf32>
    %7 = vector.multi_reduction <add>, %6, %cst_7 [1] : vector<128x1xf32> to vector<128xf32>
    %8 = vector.shape_cast %7 : vector<128xf32> to vector<1x128xf32>
    %c0_8 = arith.constant 0 : index
    %c0_9 = arith.constant 0 : index
    %9 = vector.load %arg4[%c0_8, %c0_9] : memref<1x128xf32, #tpu.memory_space<vmem>>, vector<1x128xf32>
    tpu.vector_store %arg4[%c0_8, %c0_9], %8 {strides = array<i32>} : memref<1x128xf32, #tpu.memory_space<vmem>>, vector<1x128xf32>,
    return
  }
  func.func @transform_0(%arg0: i32) -> (i32, i32) {
    %c0_i32 = arith.constant 0 : i32
    %c0_i32_0 = arith.constant 0 : i32
    return %arg0, %c0_i32 : i32, i32
  }
  func.func @transform_1(%arg0: i32) -> (i32, i32) {
    %c0_i32 = arith.constant 0 : i32
    %c0_i32_0 = arith.constant 0 : i32
    return %arg0, %c0_i32 : i32, i32
  }
  func.func @transform_2(%arg0: i32) -> (i32, i32) {
    %c0_i32 = arith.constant 0 : i32
    %c0_i32_0 = arith.constant 0 : i32
    %c0_i32_1 = arith.constant 0 : i32
    return %c0_i32, %c0_i32_0 : i32, i32
  }
  func.func @transform_3(%arg0: i32) -> (i32, i32) {
    %c0_i32 = arith.constant 0 : i32
    %c0_i32_0 = arith.constant 0 : i32
    return %c0_i32, %arg0 : i32, i32
  }
}

</mosaic_0001>

<llo_original>
// kernel: tpu_custom_call.1
$region0: #{tpu_custom_call.1}
  #allocation0 [shape = 'u32[]', space=smem, size = 0x4, offset = 0x4, fixed_abs, tag = 'smem constant byte address 0x4 - core index']
  #allocation1 [shape = 'u32[144,128]{1,0:T(1,128)}', space=vmem, size = 0x12000, scoped, tag = 'internal scratch']
  %s0 = inlined_call_operand.vmem [shape: f32[128,32], index: 0, kind: input, shape index: {}]
  %s1 = inlined_call_operand.vmem [shape: f32[128,32], index: 1, kind: input, shape index: {}]
  %s2 = inlined_call_operand.vmem [shape: f32[32,32], index: 2, kind: input, shape index: {}]
  %s3 = inlined_call_operand.hbm [shape: f32[1,128], index: 3, kind: output, shape index: {}]
  %s4 = sld [smem:[#allocation0]]
  $region22: #{tpu_custom_call.1} parent=0
    _
  %s6 = ssub.s32 1, %s4
  %s7 = scalar_select 0, %s6, %s4
  $region1: #{tpu_custom_call.1} parent=0
    #allocation2 [shape = 'u8[512]{0}', space=vmem, size = 0x400, scoped, tag = 'output window, operand 0, single buffered']
    #allocation3 [shape = 's32[1]{0}', space=sflag, size = 0x4, scoped, tag = 'scoped memory for tpu_custom_call.1']
    %8 = vsyncpa [#allocation3], 0
    // Predicated region
    $region2: #{tpu_custom_call.1} parent=1 // pred_check
      _
    $region3: #{tpu_custom_call.1} parent=1 // pred_check_branch
      %10 = sbr.rel (0) target = $region5
    $region4: #{tpu_custom_call.1} parent=1 // pred_region
      _
    $region5: #{tpu_custom_call.1} parent=1 // pred_fallthru
      _
    // Predicated region
    $region6: #{tpu_custom_call.1} parent=1 // pred_check
      _
    $region7: #{tpu_custom_call.1} parent=1 // pred_check_branch
      %12 = sbr.rel (0) target = $region9
    $region8: #{tpu_custom_call.1} parent=1 // pred_region
      _
    $region9: #{tpu_custom_call.1} parent=1 // pred_fallthru
      _
    // Predicated region
    $region10: #{tpu_custom_call.1} parent=1 // pred_check
      _
    $region11: #{tpu_custom_call.1} parent=1 // pred_check_branch
      %14 = sbr.rel (0) target = $region13
    $region12: #{tpu_custom_call.1} parent=1 // pred_region
      _
    $region13: #{tpu_custom_call.1} parent=1 // pred_fallthru
      _
    %v15 = vld [vmem:[%s0] sm:$0xff]
    %v16 = vld [vmem:[%s0 + $0x8] sm:$0xff]
    %v17 = vld [vmem:[%s0 + $0x10] sm:$0xff]
    %v18 = vld [vmem:[%s0 + $0x18] sm:$0xff]
    %v19 = vld [vmem:[%s0 + $0x20] sm:$0xff]
    %v20 = vld [vmem:[%s0 + $0x28] sm:$0xff]
    %v21 = vld [vmem:[%s0 + $0x30] sm:$0xff]
    %v22 = vld [vmem:[%s0 + $0x38] sm:$0xff]
    %v23 = vld [vmem:[%s0 + $0x40] sm:$0xff]
    %v24 = vld [vmem:[%s0 + $0x48] sm:$0xff]
    %v25 = vld [vmem:[%s0 + $0x50] sm:$0xff]
    %v26 = vld [vmem:[%s0 + $0x58] sm:$0xff]
    %v27 = vld [vmem:[%s0 + $0x60] sm:$0xff]
    %v28 = vld [vmem:[%s0 + $0x68] sm:$0xff]
    %v29 = vld [vmem:[%s0 + $0x70] sm:$0xff]
    %v30 = vld [vmem:[%s0 + $0x78] sm:$0xff]
    %v31 = vld [vmem:[%s1] sm:$0xff]
    %v32 = vld [vmem:[%s1 + $0x8] sm:$0xff]
    %v33 = vld [vmem:[%s1 + $0x10] sm:$0xff]
    %v34 = vld [vmem:[%s1 + $0x18] sm:$0xff]
    %v35 = vld [vmem:[%s1 + $0x20] sm:$0xff]
    %v36 = vld [vmem:[%s1 + $0x28] sm:$0xff]
    %v37 = vld [vmem:[%s1 + $0x30] sm:$0xff]
    %v38 = vld [vmem:[%s1 + $0x38] sm:$0xff]
    %v39 = vld [vmem:[%s1 + $0x40] sm:$0xff]
    %v40 = vld [vmem:[%s1 + $0x48] sm:$0xff]
    %v41 = vld [vmem:[%s1 + $0x50] sm:$0xff]
    %v42 = vld [vmem:[%s1 + $0x58] sm:$0xff]
    %v43 = vld [vmem:[%s1 + $0x60] sm:$0xff]
    %v44 = vld [vmem:[%s1 + $0x68] sm:$0xff]
    %v45 = vld [vmem:[%s1 + $0x70] sm:$0xff]
    %v46 = vld [vmem:[%s1 + $0x78] sm:$0xff]
    %v47 = vld [vmem:[%s2] sm:$0xff]
    %v48 = vld [vmem:[%s2 + $0x8] sm:$0xff]
    %v49 = vld [vmem:[%s2 + $0x10] sm:$0xff]
    %v50 = vld [vmem:[%s2 + $0x18] sm:$0xff]
    %vm51 = vcmask 261120
    %v53 = vsel %vm51, %v15, 0
    %v56 = vsel %vm51, %v16, 0
    %v59 = vsel %vm51, %v17, 0
    %v62 = vsel %vm51, %v18, 0
    %v65 = vsel %vm51, %v19, 0
    %v68 = vsel %vm51, %v20, 0
    %v71 = vsel %vm51, %v21, 0
    %v74 = vsel %vm51, %v22, 0
    %v77 = vsel %vm51, %v23, 0
    %v80 = vsel %vm51, %v24, 0
    %v83 = vsel %vm51, %v25, 0
    %v86 = vsel %vm51, %v26, 0
    %v89 = vsel %vm51, %v27, 0
    %v92 = vsel %vm51, %v28, 0
    %v95 = vsel %vm51, %v29, 0
    %v98 = vsel %vm51, %v30, 0
    %100 = vmatprep.subr.mxu0 0.0
    %101 = vmatpush1.msra.mxu0 %v47
    %102 = vmatprep.subr.mxu0 0.0
    %103 = vmatpush1.msra.mxu0 %v48
    %104 = vmatprep.subr.mxu0 0.0
    %105 = vmatpush1.msra.mxu0 %v49
    %106 = vmatprep.subr.mxu0 0.0
    %107 = vmatpush1.msra.mxu0 %v50
    %108 = vmatprep.subr.mxu0 0.0
    %109 = vmatpush1.msra.mxu0 0.0
    %110 = vmatprep.subr.mxu0 0.0
    %111 = vmatpush1.msra.mxu0 0.0
    %112 = vmatprep.subr.mxu0 0.0
    %113 = vmatpush1.msra.mxu0 0.0
    %114 = vmatprep.subr.mxu0 0.0
    %115 = vmatpush1.msra.mxu0 0.0
    %116 = vmatprep.subr.mxu0 0.0
    %117 = vmatpush1.msra.mxu0 0.0
    %118 = vmatprep.subr.mxu0 0.0
    %119 = vmatpush1.msra.mxu0 0.0
    %120 = vmatprep.subr.mxu0 0.0
    %121 = vmatpush1.msra.mxu0 0.0
    %122 = vmatprep.subr.mxu0 0.0
    %123 = vmatpush1.msra.mxu0 0.0
    %124 = vmatprep.subr.mxu0 0.0
    %125 = vmatpush1.msra.mxu0 0.0
    %126 = vmatprep.subr.mxu0 0.0
    %127 = vmatpush1.msra.mxu0 0.0
    %128 = vmatprep.subr.mxu0 0.0
    %129 = vmatpush1.msra.mxu0 0.0
    %130 = vmatprep.subr.mxu0 0.0
    %131 = vmatpush1.msra.mxu0 0.0
    %132 = vmatprep.subr.mxu0 0.0
    %133 = vmatpush1.msra.mxu0 0.0
    %134 = vmatprep.subr.mxu0 0.0
    %135 = vmatpush1.msra.mxu0 0.0
    %136 = vmatprep.subr.mxu0 0.0
    %137 = vmatpush1.msra.mxu0 0.0
    %138 = vmatprep.subr.mxu0 0.0
    %139 = vmatpush1.msra.mxu0 0.0
    %140 = vmatprep.subr.mxu0 0.0
    %141 = vmatpush1.msra.mxu0 0.0
    %142 = vmatprep.subr.mxu0 0.0
    %143 = vmatpush1.msra.mxu0 0.0
    %144 = vmatprep.subr.mxu0 0.0
    %145 = vmatpush1.msra.mxu0 0.0
    %146 = vmatprep.subr.mxu0 0.0
    %147 = vmatpush1.msra.mxu0 0.0
    %148 = vmatprep.subr.mxu0 0.0
    %149 = vmatpush1.msra.mxu0 0.0
    %150 = vmatprep.subr.mxu0 0.0
    %151 = vmatpush1.msra.mxu0 0.0
    %152 = vmatprep.subr.mxu0 0.0
    %153 = vmatpush1.msra.mxu0 0.0
    %154 = vmatprep.subr.mxu0 0.0
    %155 = vmatpush1.msra.mxu0 0.0
    %156 = vmatprep.subr.mxu0 0.0
    %157 = vmatpush1.msra.mxu0 0.0
    %158 = vmatprep.subr.mxu0 0.0
    %159 = vmatpush1.msra.mxu0 0.0
    %160 = vmatprep.subr.mxu0 0.0
    %161 = vmatpush1.msra.mxu0 0.0
    %162 = vmatprep.subr.mxu0 0.0
    %163 = vmatpush1.msra.mxu0 0.0
    %164 = vmatprep.mubr.f32.mxu0 0.0
    %165 = vmatmul.mubr.f32.gmra.mrb[0].mxu0 %v53
    %v166 = vpop.f32.mrb[0].mxu0
    %v167 = vadd.f32 0.0, %v166
    %v168 = vpop.f32.mrb[0].mxu0
    %169 = vmatprep.mubr.f32.mxu0 0.0
    %170 = vmatmul.mubr.f32.gmra.mrb[0].mxu0 %v56
    %v171 = vpop.f32.mrb[0].mxu0
    %v172 = vadd.f32 0.0, %v171
    %v173 = vpop.f32.mrb[0].mxu0
    %174 = vmatprep.mubr.f32.mxu0 0.0
    %175 = vmatmul.mubr.f32.gmra.mrb[0].mxu0 %v59
    %v176 = vpop.f32.mrb[0].mxu0
    %v177 = vadd.f32 0.0, %v176
    %v178 = vpop.f32.mrb[0].mxu0
    %179 = vmatprep.mubr.f32.mxu0 0.0
    %180 = vmatmul.mubr.f32.gmra.mrb[0].mxu0 %v62
    %v181 = vpop.f32.mrb[0].mxu0
    %v182 = vadd.f32 0.0, %v181
    %v183 = vpop.f32.mrb[0].mxu0
    %184 = vmatprep.mubr.f32.mxu0 0.0
    %185 = vmatmul.mubr.f32.gmra.mrb[0].mxu0 %v65
    %v186 = vpop.f32.mrb[0].mxu0
    %v187 = vadd.f32 0.0, %v186
    %v188 = vpop.f32.mrb[0].mxu0
    %189 = vmatprep.mubr.f32.mxu0 0.0
    %190 = vmatmul.mubr.f32.gmra.mrb[0].mxu0 %v68
    %v191 = vpop.f32.mrb[0].mxu0
    %v192 = vadd.f32 0.0, %v191
    %v193 = vpop.f32.mrb[0].mxu0
    %194 = vmatprep.mubr.f32.mxu0 0.0
    %195 = vmatmul.mubr.f32.gmra.mrb[0].mxu0 %v71
    %v196 = vpop.f32.mrb[0].mxu0
    %v197 = vadd.f32 0.0, %v196
    %v198 = vpop.f32.mrb[0].mxu0
    %199 = vmatprep.mubr.f32.mxu0 0.0
    %200 = vmatmul.mubr.f32.gmra.mrb[0].mxu0 %v74
    %v201 = vpop.f32.mrb[0].mxu0
    %v202 = vadd.f32 0.0, %v201
    %v203 = vpop.f32.mrb[0].mxu0
    %204 = vmatprep.mubr.f32.mxu0 0.0
    %205 = vmatmul.mubr.f32.gmra.mrb[0].mxu0 %v77
    %v206 = vpop.f32.mrb[0].mxu0
    %v207 = vadd.f32 0.0, %v206
    %v208 = vpop.f32.mrb[0].mxu0
    %209 = vmatprep.mubr.f32.mxu0 0.0
    %210 = vmatmul.mubr.f32.gmra.mrb[0].mxu0 %v80
    %v211 = vpop.f32.mrb[0].mxu0
    %v212 = vadd.f32 0.0, %v211
    %v213 = vpop.f32.mrb[0].mxu0
    %214 = vmatprep.mubr.f32.mxu0 0.0
    %215 = vmatmul.mubr.f32.gmra.mrb[0].mxu0 %v83
    %v216 = vpop.f32.mrb[0].mxu0
    %v217 = vadd.f32 0.0, %v216
    %v218 = vpop.f32.mrb[0].mxu0
    %219 = vmatprep.mubr.f32.mxu0 0.0
    %220 = vmatmul.mubr.f32.gmra.mrb[0].mxu0 %v86
    %v221 = vpop.f32.mrb[0].mxu0
    %v222 = vadd.f32 0.0, %v221
    %v223 = vpop.f32.mrb[0].mxu0
    %224 = vmatprep.mubr.f32.mxu0 0.0
    %225 = vmatmul.mubr.f32.gmra.mrb[0].mxu0 %v89
    %v226 = vpop.f32.mrb[0].mxu0
    %v227 = vadd.f32 0.0, %v226
    %v228 = vpop.f32.mrb[0].mxu0
    %229 = vmatprep.mubr.f32.mxu0 0.0
    %230 = vmatmul.mubr.f32.gmra.mrb[0].mxu0 %v92
    %v231 = vpop.f32.mrb[0].mxu0
    %v232 = vadd.f32 0.0, %v231
    %v233 = vpop.f32.mrb[0].mxu0
    %234 = vmatprep.mubr.f32.mxu0 0.0
    %235 = vmatmul.mubr.f32.gmra.mrb[0].mxu0 %v95
    %v236 = vpop.f32.mrb[0].mxu0
    %v237 = vadd.f32 0.0, %v236
    %v238 = vpop.f32.mrb[0].mxu0
    %239 = vmatprep.mubr.f32.mxu0 0.0
    %240 = vmatmul.mubr.f32.gmra.mrb[0].mxu0 %v98
    %v241 = vpop.f32.mrb[0].mxu0
    %v242 = vadd.f32 0.0, %v241
    %v243 = vpop.f32.mrb[0].mxu0
    %244 = vdwg.mxu0
    %v245 = vmul.f32 %v167, %v31
    %v246 = vmul.f32 %v172, %v32
    %v247 = vmul.f32 %v177, %v33
    %v248 = vmul.f32 %v182, %v34
    %v249 = vmul.f32 %v187, %v35
    %v250 = vmul.f32 %v192, %v36
    %v251 = vmul.f32 %v197, %v37
    %v252 = vmul.f32 %v202, %v38
    %v253 = vmul.f32 %v207, %v39
    %v254 = vmul.f32 %v212, %v40
    %v255 = vmul.f32 %v217, %v41
    %v256 = vmul.f32 %v222, %v42
    %v257 = vmul.f32 %v227, %v43
    %v258 = vmul.f32 %v232, %v44
    %v259 = vmul.f32 %v237, %v45
    %v260 = vmul.f32 %v242, %v46
    %v262 = vsel %vm51, %v245, 0
    %v265 = vsel %vm51, %v246, 0
    %v268 = vsel %vm51, %v247, 0
    %v271 = vsel %vm51, %v248, 0
    %v274 = vsel %vm51, %v249, 0
    %v277 = vsel %vm51, %v250, 0
    %v280 = vsel %vm51, %v251, 0
    %v283 = vsel %vm51, %v252, 0
    %v286 = vsel %vm51, %v253, 0
    %v289 = vsel %vm51, %v254, 0
    %v292 = vsel %vm51, %v255, 0
    %v295 = vsel %vm51, %v256, 0
    %v298 = vsel %vm51, %v257, 0
    %v301 = vsel %vm51, %v258, 0
    %v304 = vsel %vm51, %v259, 0
    %v307 = vsel %vm51, %v260, 0
    %309 = vmatprep.subr.mxu0 0.0
    %310 = vmatpush1.msra.mxu0 1.0
    %311 = vmatprep.subr.mxu0 0.0
    %312 = vmatpush1.msra.mxu0 1.0
    %313 = vmatprep.subr.mxu0 0.0
    %314 = vmatpush1.msra.mxu0 1.0
    %315 = vmatprep.subr.mxu0 0.0
    %316 = vmatpush1.msra.mxu0 1.0
    %317 = vmatprep.subr.mxu0 0.0
    %318 = vmatpush1.msra.mxu0 0.0
    %319 = vmatprep.subr.mxu0 0.0
    %320 = vmatpush1.msra.mxu0 0.0
    %321 = vmatprep.subr.mxu0 0.0
    %322 = vmatpush1.msra.mxu0 0.0
    %323 = vmatprep.subr.mxu0 0.0
    %324 = vmatpush1.msra.mxu0 0.0
    %325 = vmatprep.subr.mxu0 0.0
    %326 = vmatpush1.msra.mxu0 0.0
    %327 = vmatprep.subr.mxu0 0.0
    %328 = vmatpush1.msra.mxu0 0.0
    %329 = vmatprep.subr.mxu0 0.0
    %330 = vmatpush1.msra.mxu0 0.0
    %331 = vmatprep.subr.mxu0 0.0
    %332 = vmatpush1.msra.mxu0 0.0
    %333 = vmatprep.subr.mxu0 0.0
    %334 = vmatpush1.msra.mxu0 0.0
    %335 = vmatprep.subr.mxu0 0.0
    %336 = vmatpush1.msra.mxu0 0.0
    %337 = vmatprep.subr.mxu0 0.0
    %338 = vmatpush1.msra.mxu0 0.0
    %339 = vmatprep.subr.mxu0 0.0
    %340 = vmatpush1.msra.mxu0 0.0
    %341 = vmatprep.subr.mxu0 0.0
    %342 = vmatpush1.msra.mxu0 0.0
    %343 = vmatprep.subr.mxu0 0.0
    %344 = vmatpush1.msra.mxu0 0.0
    %345 = vmatprep.subr.mxu0 0.0
    %346 = vmatpush1.msra.mxu0 0.0
    %347 = vmatprep.subr.mxu0 0.0
    %348 = vmatpush1.msra.mxu0 0.0
    %349 = vmatprep.subr.mxu0 0.0
    %350 = vmatpush1.msra.mxu0 0.0
    %351 = vmatprep.subr.mxu0 0.0
    %352 = vmatpush1.msra.mxu0 0.0
    %353 = vmatprep.subr.mxu0 0.0
    %354 = vmatpush1.msra.mxu0 0.0
    %355 = vmatprep.subr.mxu0 0.0
    %356 = vmatpush1.msra.mxu0 0.0
    %357 = vmatprep.subr.mxu0 0.0
    %358 = vmatpush1.msra.mxu0 0.0
    %359 = vmatprep.subr.mxu0 0.0
    %360 = vmatpush1.msra.mxu0 0.0
    %361 = vmatprep.subr.mxu0 0.0
    %362 = vmatpush1.msra.mxu0 0.0
    %363 = vmatprep.subr.mxu0 0.0
    %364 = vmatpush1.msra.mxu0 0.0
    %365 = vmatprep.subr.mxu0 0.0
    %366 = vmatpush1.msra.mxu0 0.0
    %367 = vmatprep.subr.mxu0 0.0
    %368 = vmatpush1.msra.mxu0 0.0
    %369 = vmatprep.subr.mxu0 0.0
    %370 = vmatpush1.msra.mxu0 0.0
    %371 = vmatprep.subr.mxu0 0.0
    %372 = vmatpush1.msra.mxu0 0.0
    %373 = vmatprep.mubr.f32.mxu0 0.0
    %374 = vmatmul.mubr.f32.gmra.mrb[0].mxu0 %v262
    %v375 = vpop.f32.mrb[0].mxu0
    %v376 = vadd.f32 0.0, %v375
    %v377 = vpop.f32.mrb[0].mxu0
    %378 = vmatprep.mubr.f32.mxu0 0.0
    %379 = vmatmul.mubr.f32.gmra.mrb[0].mxu0 %v265
    %v380 = vpop.f32.mrb[0].mxu0
    %v381 = vadd.f32 0.0, %v380
    %v382 = vpop.f32.mrb[0].mxu0
    %383 = vmatprep.mubr.f32.mxu0 0.0
    %384 = vmatmul.mubr.f32.gmra.mrb[0].mxu0 %v268
    %v385 = vpop.f32.mrb[0].mxu0
    %v386 = vadd.f32 0.0, %v385
    %v387 = vpop.f32.mrb[0].mxu0
    %388 = vmatprep.mubr.f32.mxu0 0.0
    %389 = vmatmul.mubr.f32.gmra.mrb[0].mxu0 %v271
    %v390 = vpop.f32.mrb[0].mxu0
    %v391 = vadd.f32 0.0, %v390
    %v392 = vpop.f32.mrb[0].mxu0
    %393 = vmatprep.mubr.f32.mxu0 0.0
    %394 = vmatmul.mubr.f32.gmra.mrb[0].mxu0 %v274
    %v395 = vpop.f32.mrb[0].mxu0
    %v396 = vadd.f32 0.0, %v395
    %v397 = vpop.f32.mrb[0].mxu0
    %398 = vmatprep.mubr.f32.mxu0 0.0
    %399 = vmatmul.mubr.f32.gmra.mrb[0].mxu0 %v277
    %v400 = vpop.f32.mrb[0].mxu0
    %v401 = vadd.f32 0.0, %v400
    %v402 = vpop.f32.mrb[0].mxu0
    %403 = vmatprep.mubr.f32.mxu0 0.0
    %404 = vmatmul.mubr.f32.gmra.mrb[0].mxu0 %v280
    %v405 = vpop.f32.mrb[0].mxu0
    %v406 = vadd.f32 0.0, %v405
    %v407 = vpop.f32.mrb[0].mxu0
    %408 = vmatprep.mubr.f32.mxu0 0.0
    %409 = vmatmul.mubr.f32.gmra.mrb[0].mxu0 %v283
    %v410 = vpop.f32.mrb[0].mxu0
    %v411 = vadd.f32 0.0, %v410
    %v412 = vpop.f32.mrb[0].mxu0
    %413 = vmatprep.mubr.f32.mxu0 0.0
    %414 = vmatmul.mubr.f32.gmra.mrb[0].mxu0 %v286
    %v415 = vpop.f32.mrb[0].mxu0
    %v416 = vadd.f32 0.0, %v415
    %v417 = vpop.f32.mrb[0].mxu0
    %418 = vmatprep.mubr.f32.mxu0 0.0
    %419 = vmatmul.mubr.f32.gmra.mrb[0].mxu0 %v289
    %v420 = vpop.f32.mrb[0].mxu0
    %v421 = vadd.f32 0.0, %v420
    %v422 = vpop.f32.mrb[0].mxu0
    %423 = vmatprep.mubr.f32.mxu0 0.0
    %424 = vmatmul.mubr.f32.gmra.mrb[0].mxu0 %v292
    %v425 = vpop.f32.mrb[0].mxu0
    %v426 = vadd.f32 0.0, %v425
    %v427 = vpop.f32.mrb[0].mxu0
    %428 = vmatprep.mubr.f32.mxu0 0.0
    %429 = vmatmul.mubr.f32.gmra.mrb[0].mxu0 %v295
    %v430 = vpop.f32.mrb[0].mxu0
    %v431 = vadd.f32 0.0, %v430
    %v432 = vpop.f32.mrb[0].mxu0
    %433 = vmatprep.mubr.f32.mxu0 0.0
    %434 = vmatmul.mubr.f32.gmra.mrb[0].mxu0 %v298
    %v435 = vpop.f32.mrb[0].mxu0
    %v436 = vadd.f32 0.0, %v435
    %v437 = vpop.f32.mrb[0].mxu0
    %438 = vmatprep.mubr.f32.mxu0 0.0
    %439 = vmatmul.mubr.f32.gmra.mrb[0].mxu0 %v301
    %v440 = vpop.f32.mrb[0].mxu0
    %v441 = vadd.f32 0.0, %v440
    %v442 = vpop.f32.mrb[0].mxu0
    %443 = vmatprep.mubr.f32.mxu0 0.0
    %444 = vmatmul.mubr.f32.gmra.mrb[0].mxu0 %v304
    %v445 = vpop.f32.mrb[0].mxu0
    %v446 = vadd.f32 0.0, %v445
    %v447 = vpop.f32.mrb[0].mxu0
    %448 = vmatprep.mubr.f32.mxu0 0.0
    %449 = vmatmul.mubr.f32.gmra.mrb[0].mxu0 %v307
    %v450 = vpop.f32.mrb[0].mxu0
    %v451 = vadd.f32 0.0, %v450
    %v452 = vpop.f32.mrb[0].mxu0
    %453 = vdwg.mxu0
    %v454 = vadd.f32 %v376, 0.0
    %v455 = vadd.f32 %v381, 0.0
    %v456 = vadd.f32 %v386, 0.0
    %v457 = vadd.f32 %v391, 0.0
    %v458 = vadd.f32 %v396, 0.0
    %v459 = vadd.f32 %v401, 0.0
    %v460 = vadd.f32 %v406, 0.0
    %v461 = vadd.f32 %v411, 0.0
    %v462 = vadd.f32 %v416, 0.0
    %v463 = vadd.f32 %v421, 0.0
    %v464 = vadd.f32 %v426, 0.0
    %v465 = vadd.f32 %v431, 0.0
    %v466 = vadd.f32 %v436, 0.0
    %v467 = vadd.f32 %v441, 0.0
    %v468 = vadd.f32 %v446, 0.0
    %v469 = vadd.f32 %v451, 0.0
    %486 = vset.pattern.permute.xlu0 0
    %487 = vperm.xlu0 %486, %v454
    %v488 = vpop.permute.xlu0 %487
    %489 = vset.pattern.permute.xlu0 0
    %490 = vperm.xlu0 %489, %v455
    %v491 = vpop.permute.xlu0 %490
    %492 = vset.pattern.permute.xlu0 0
    %493 = vperm.xlu0 %492, %v456
    %v494 = vpop.permute.xlu0 %493
    %495 = vset.pattern.permute.xlu0 0
    %496 = vperm.xlu0 %495, %v457
    %v497 = vpop.permute.xlu0 %496
    %498 = vset.pattern.permute.xlu0 0
    %499 = vperm.xlu0 %498, %v458
    %v500 = vpop.permute.xlu0 %499
    %501 = vset.pattern.permute.xlu0 0
    %502 = vperm.xlu0 %501, %v459
    %v503 = vpop.permute.xlu0 %502
    %504 = vset.pattern.permute.xlu0 0
    %505 = vperm.xlu0 %504, %v460
    %v506 = vpop.permute.xlu0 %505
    %507 = vset.pattern.permute.xlu0 0
    %508 = vperm.xlu0 %507, %v461
    %v509 = vpop.permute.xlu0 %508
    %510 = vset.pattern.permute.xlu0 0
    %511 = vperm.xlu0 %510, %v462
    %v512 = vpop.permute.xlu0 %511
    %513 = vset.pattern.permute.xlu0 0
    %514 = vperm.xlu0 %513, %v463
    %v515 = vpop.permute.xlu0 %514
    %516 = vset.pattern.permute.xlu0 0
    %517 = vperm.xlu0 %516, %v464
    %v518 = vpop.permute.xlu0 %517
    %519 = vset.pattern.permute.xlu0 0
    %520 = vperm.xlu0 %519, %v465
    %v521 = vpop.permute.xlu0 %520
    %522 = vset.pattern.permute.xlu0 0
    %523 = vperm.xlu0 %522, %v466
    %v524 = vpop.permute.xlu0 %523
    %525 = vset.pattern.permute.xlu0 0
    %526 = vperm.xlu0 %525, %v467
    %v527 = vpop.permute.xlu0 %526
    %528 = vset.pattern.permute.xlu0 0
    %529 = vperm.xlu0 %528, %v468
    %v530 = vpop.permute.xlu0 %529
    %531 = vset.pattern.permute.xlu0 0
    %532 = vperm.xlu0 %531, %v469
    %v533 = vpop.permute.xlu0 %532
    %v534 = vlaneseq
    %v535 = vand.u32 %v534, 127
    %v536 = vlaneseq
    %v537 = vshrl.u32 %v536, 7
    %v538 = vsub.s32 %v535, %v537
    %v539 = vrot.slane %v488, %v538
    %v540 = vadd.s32 %v535, 4294967288
    %v541 = vlaneseq
    %v542 = vshrl.u32 %v541, 7
    %v543 = vsub.s32 %v540, %v542
    %v544 = vrot.slane %v491, %v543
    %vm545 = vcmask 130112
    %v546 = vsel %vm545, %v544, %v539
    %v547 = vadd.s32 %v535, 4294967280
    %v548 = vlaneseq
    %v549 = vshrl.u32 %v548, 7
    %v550 = vsub.s32 %v547, %v549
    %v551 = vrot.slane %v494, %v550
    %vm552 = vcmask 195712
    %v553 = vsel %vm552, %v551, %v546
    %v554 = vadd.s32 %v535, 4294967272
    %v555 = vlaneseq
    %v556 = vshrl.u32 %v555, 7
    %v557 = vsub.s32 %v554, %v556
    %v558 = vrot.slane %v497, %v557
    %vm559 = vcmask 261312
    %v560 = vsel %vm559, %v558, %v553
    %v561 = vadd.s32 %v535, 4294967264
    %v562 = vlaneseq
    %v563 = vshrl.u32 %v562, 7
    %v564 = vsub.s32 %v561, %v563
    %v565 = vrot.slane %v500, %v564
    %vm566 = vcmask 326912
    %v567 = vsel %vm566, %v565, %v560
    %v568 = vadd.s32 %v535, 4294967256
    %v569 = vlaneseq
    %v570 = vshrl.u32 %v569, 7
    %v571 = vsub.s32 %v568, %v570
    %v572 = vrot.slane %v503, %v571
    %vm573 = vcmask 392512
    %v574 = vsel %vm573, %v572, %v567
    %v575 = vadd.s32 %v535, 4294967248
    %v576 = vlaneseq
    %v577 = vshrl.u32 %v576, 7
    %v578 = vsub.s32 %v575, %v577
    %v579 = vrot.slane %v506, %v578
    %vm580 = vcmask 458112
    %v581 = vsel %vm580, %v579, %v574
    %v582 = vadd.s32 %v535, 4294967240
    %v583 = vlaneseq
    %v584 = vshrl.u32 %v583, 7
    %v585 = vsub.s32 %v582, %v584
    %v586 = vrot.slane %v509, %v585
    %vm587 = vcmask 523712
    %v588 = vsel %vm587, %v586, %v581
    %v589 = vadd.s32 %v535, 4294967232
    %v590 = vlaneseq
    %v591 = vshrl.u32 %v590, 7
    %v592 = vsub.s32 %v589, %v591
    %v593 = vrot.slane %v512, %v592
    %vm594 = vcmask 589312
    %v595 = vsel %vm594, %v593, %v588
    %v596 = vadd.s32 %v535, 4294967224
    %v597 = vlaneseq
    %v598 = vshrl.u32 %v597, 7
    %v599 = vsub.s32 %v596, %v598
    %v600 = vrot.slane %v515, %v599
    %vm601 = vcmask 654912
    %v602 = vsel %vm601, %v600, %v595
    %v603 = vadd.s32 %v535, 4294967216
    %v604 = vlaneseq
    %v605 = vshrl.u32 %v604, 7
    %v606 = vsub.s32 %v603, %v605
    %v607 = vrot.slane %v518, %v606
    %vm608 = vcmask 720512
    %v609 = vsel %vm608, %v607, %v602
    %v610 = vadd.s32 %v535, 4294967208
    %v611 = vlaneseq
    %v612 = vshrl.u32 %v611, 7
    %v613 = vsub.s32 %v610, %v612
    %v614 = vrot.slane %v521, %v613
    %vm615 = vcmask 786112
    %v616 = vsel %vm615, %v614, %v609
    %v617 = vadd.s32 %v535, 4294967200
    %v618 = vlaneseq
    %v619 = vshrl.u32 %v618, 7
    %v620 = vsub.s32 %v617, %v619
    %v621 = vrot.slane %v524, %v620
    %vm622 = vcmask 851712
    %v623 = vsel %vm622, %v621, %v616
    %v624 = vadd.s32 %v535, 4294967192
    %v625 = vlaneseq
    %v626 = vshrl.u32 %v625, 7
    %v627 = vsub.s32 %v624, %v626
    %v628 = vrot.slane %v527, %v627
    %vm629 = vcmask 917312
    %v630 = vsel %vm629, %v628, %v623
    %v631 = vadd.s32 %v535, 4294967184
    %v632 = vlaneseq
    %v633 = vshrl.u32 %v632, 7
    %v634 = vsub.s32 %v631, %v633
    %v635 = vrot.slane %v530, %v634
    %vm636 = vcmask 982912
    %v637 = vsel %vm636, %v635, %v630
    %v638 = vadd.s32 %v535, 4294967176
    %v639 = vlaneseq
    %v640 = vshrl.u32 %v639, 7
    %v641 = vsub.s32 %v638, %v640
    %v642 = vrot.slane %v533, %v641
    %vm643 = vcmask 1048512
    %v644 = vsel %vm643, %v642, %v637
    %646 = vst [vmem:[#allocation2] sm:$0x1] %v644
    // Predicated region
    $region14: #{tpu_custom_call.1} parent=1 // pred_check
      _
    $region15: #{tpu_custom_call.1} parent=1 // pred_check_branch
      %648 = sbr.rel (0) target = $region17
    $region16: #{tpu_custom_call.1} parent=1 // pred_region
      %s650 = ssub.s32 16, 16
      %651 = vsyncadd [#allocation3], %s650
      %s653 = sshll.u32 [#allocation2], 4
      %s654 = int_to_ptr.vmem [resolvable:$true] %s653
      %656 = dma.vmem_to_hbm [thread:$0]  %s654, 16, %s3, [#allocation3]
    $region17: #{tpu_custom_call.1} parent=1 // pred_fallthru
      _
    // Predicated region
    $region18: #{tpu_custom_call.1} parent=1 // pred_check
      _
    $region19: #{tpu_custom_call.1} parent=1 // pred_check_branch
      %658 = sbr.rel (0) target = $region21
    $region20: #{tpu_custom_call.1} parent=1 // pred_region
      %659 = dma.done [#allocation3], 16
    $region21: #{tpu_custom_call.1} parent=1 // pred_fallthru
      _
    %660 = vsyncpa [#allocation3], 1

</llo_original>
